<compile_context>
chip_gen: v7x
topology: tpu7x:2x2x1
jax: 0.10.0
libtpu: 0.0.40
codegen_flags: <defaults>
</compile_context>

<pallas_src>
import jax
import jax.numpy as jnp
from jax.experimental import pallas as pl
from jax.experimental.pallas import tpu as pltpu


def _round_up(x, m):
    return (x + m - 1) // m * m


def _get_gradient_kernel(x_ref, o_ref, xp_ref):
    """Fused pad + shifted differences + gradient magnitude.

    x_ref : (B, H, W)           raw channel-0 tile (unpadded, from HBM)
    o_ref : (B, H+2, WO_PAD)    lane-dense output tile (WO_PAD % 128 == 0)
    xp_ref: (B, H+4, WO_PAD+2)  VMEM scratch holding the zero-padded image
    """
    b, h, w = x_ref.shape
    _, ho, wo_pad = o_ref.shape

    # Build the zero-padded image in VMEM.  Zero every grid step so the
    # border is correct even though the scratch persists across iterations
    # (and across cores when the batch axis is sharded).
    xp_ref[...] = jnp.zeros_like(xp_ref)
    xp_ref[:, pl.ds(2, h), pl.ds(2, w)] = x_ref[...]

    # Four statically shifted views of the padded scratch — Mosaic emits
    # offset loads (sublane/lane shifts) instead of materializing copies.
    top = xp_ref[:, pl.ds(0, ho), pl.ds(1, wo_pad)]   # xp[i,   j+1]
    bot = xp_ref[:, pl.ds(2, ho), pl.ds(1, wo_pad)]   # xp[i+2, j+1]
    lef = xp_ref[:, pl.ds(1, ho), pl.ds(0, wo_pad)]   # xp[i+1, j  ]
    rig = xp_ref[:, pl.ds(1, ho), pl.ds(2, wo_pad)]   # xp[i+1, j+2]

    gv = bot - top          # kernel_v = [[0,-1,0],[0,0,0],[0,1,0]]
    gh = rig - lef          # kernel_h = [[0,0,0],[-1,0,1],[0,0,0]]
    o_ref[...] = jnp.sqrt(gv * gv + gh * gh + 1e-6)


def get_gradient(x, *, b_tile=None, vmem_budget_bytes=8 << 20):
    """Pallas implementation of Get_gradient.forward.

    x: (N, C, H, W) NCHW (only channel 0 is used, as in the reference).
    returns: (N, 1, H+2, W+2) float32.
    """
    assert x.ndim == 4
    n, _, h, w = x.shape
    ho, wo = h + 2, w + 2
    wo_pad = _round_up(wo, 128)   # lane-dense output width
    hp = h + 4                    # padded height
    ws = wo_pad + 2               # scratch width (column shifts 0..2 + WO_PAD)

    if b_tile is None:
        # Largest divisor of N whose per-step VMEM footprint (inputs/outputs
        # double-buffered by the pipeline + scratch) stays under budget —
        # conservative enough for v5e's 16 MiB scoped default.
        per_b = 4 * (2 * h * w + 2 * ho * wo_pad + hp * ws)
        b_tile = max(1, min(n, vmem_budget_bytes // max(per_b, 1)))
        while n % b_tile:
            b_tile -= 1
    assert n % b_tile == 0

    x = x.astype(jnp.float32)

    out = pl.pallas_call(
        _get_gradient_kernel,
        out_shape=jax.ShapeDtypeStruct((n, ho, wo_pad), jnp.float32),
        grid_spec=pltpu.PrefetchScalarGridSpec(
            num_scalar_prefetch=0,
            grid=(n // b_tile,),
            in_specs=[
                # Channel-0 selection folded into the BlockSpec: the channel
                # dim is squeezed (None) and the index_map pins it to 0, so
                # only channel-0 bytes are ever DMA'd from HBM.
                pl.BlockSpec((b_tile, None, h, w), lambda b: (b, 0, 0, 0)),
            ],
            out_specs=pl.BlockSpec((b_tile, ho, wo_pad), lambda b: (b, 0, 0)),
            scratch_shapes=[pltpu.VMEM((b_tile, hp, ws), jnp.float32)],
        ),
        compiler_params=pltpu.CompilerParams(
            dimension_semantics=("parallel",),
        ),
    )(x)

    # Strip the lane padding and restore the channel dim.
    return out[:, None, :, :wo]


def _reference_jax(x):
    """Pure-JAX reference reproducing the PyTorch semantics."""
    x0 = x[:, 0].astype(jnp.float32)
    xp = jnp.pad(x0, ((0, 0), (2, 2), (2, 2)))
    v = xp[:, 2:, 1:-1] - xp[:, :-2, 1:-1]
    h = xp[:, 1:-1, 2:] - xp[:, 1:-1, :-2]
    return jnp.sqrt(v * v + h * h + 1e-6)[:, None]


if __name__ == "__main__":
    key = jax.random.PRNGKey(0)
    x = jax.random.normal(key, (2, 4, 16, 16), dtype=jnp.float32)

    y = get_gradient(x)
    y = jax.block_until_ready(y)

    assert y.shape == (2, 1, 18, 18), y.shape
    y_ref = _reference_jax(x)
    assert jnp.allclose(y, y_ref, atol=1e-5, rtol=1e-5)

    print("KERNEL_OK")
</pallas_src>

<mosaic_0001>
module attributes {stable_mosaic.version = 11 : i64} {
  func.func @_get_gradient_kernel(%arg0: i32, %arg1: memref<2x1x16x16xf32, #tpu.memory_space<vmem>>, %arg2: memref<2x18x128xf32, #tpu.memory_space<vmem>>, %arg3: memref<2x20x130xf32, #tpu.memory_space<vmem>>) attributes {dimension_semantics = [#tpu.dimension_semantics<parallel>], iteration_bounds = array<i64: 1>, scalar_prefetch = 0 : i64, scratch_operands = 1 : i64, tpu.core_type = #tpu.core_type<tc>, window_params = [{transform_indices = @transform_0, window_bounds = array<i64: 2, 1, 16, 16>}, {transform_indices = @transform_1, window_bounds = array<i64: 2, 18, 128>}]} {
    %cst = arith.constant 0.000000e+00 : f32
    %0 = vector.broadcast %cst : f32 to vector<2x20x130xf32>
    %c0 = arith.constant 0 : index
    %c0_0 = arith.constant 0 : index
    %c0_1 = arith.constant 0 : index
    %1 = vector.load %arg3[%c0, %c0_0, %c0_1] : memref<2x20x130xf32, #tpu.memory_space<vmem>>, vector<2x20x130xf32>
    tpu.vector_store %arg3[%c0, %c0_0, %c0_1], %0 {strides = array<i32>} : memref<2x20x130xf32, #tpu.memory_space<vmem>>, vector<2x20x130xf32>,
    %c0_2 = arith.constant 0 : index
    %c0_3 = arith.constant 0 : index
    %c0_4 = arith.constant 0 : index
    %c0_5 = arith.constant 0 : index
    %2 = vector.load %arg1[%c0_2, %c0_3, %c0_4, %c0_5] : memref<2x1x16x16xf32, #tpu.memory_space<vmem>>, vector<2x1x16x16xf32>
    %3 = vector.shape_cast %2 : vector<2x1x16x16xf32> to vector<2x16x16xf32>
    %c0_6 = arith.constant 0 : index
    %c2 = arith.constant 2 : index
    %c2_7 = arith.constant 2 : index
    %4 = vector.load %arg3[%c0_6, %c2, %c2_7] : memref<2x20x130xf32, #tpu.memory_space<vmem>>, vector<2x16x16xf32>
    tpu.vector_store %arg3[%c0_6, %c2, %c2_7], %3 {strides = array<i32>} : memref<2x20x130xf32, #tpu.memory_space<vmem>>, vector<2x16x16xf32>,
    %c0_8 = arith.constant 0 : index
    %c0_9 = arith.constant 0 : index
    %c1 = arith.constant 1 : index
    %5 = vector.load %arg3[%c0_8, %c0_9, %c1] : memref<2x20x130xf32, #tpu.memory_space<vmem>>, vector<2x18x128xf32>
    %c0_10 = arith.constant 0 : index
    %c2_11 = arith.constant 2 : index
    %c1_12 = arith.constant 1 : index
    %6 = vector.load %arg3[%c0_10, %c2_11, %c1_12] : memref<2x20x130xf32, #tpu.memory_space<vmem>>, vector<2x18x128xf32>
    %c0_13 = arith.constant 0 : index
    %c1_14 = arith.constant 1 : index
    %c0_15 = arith.constant 0 : index
    %7 = vector.load %arg3[%c0_13, %c1_14, %c0_15] : memref<2x20x130xf32, #tpu.memory_space<vmem>>, vector<2x18x128xf32>
    %c0_16 = arith.constant 0 : index
    %c1_17 = arith.constant 1 : index
    %c2_18 = arith.constant 2 : index
    %8 = vector.load %arg3[%c0_16, %c1_17, %c2_18] : memref<2x20x130xf32, #tpu.memory_space<vmem>>, vector<2x18x128xf32>
    %9 = arith.subf %6, %5 : vector<2x18x128xf32>
    %10 = arith.subf %8, %7 : vector<2x18x128xf32>
    %11 = arith.mulf %9, %9 : vector<2x18x128xf32>
    %12 = arith.mulf %10, %10 : vector<2x18x128xf32>
    %13 = arith.addf %11, %12 : vector<2x18x128xf32>
    %cst_19 = arith.constant 9.99999997E-7 : f32
    %14 = vector.broadcast %cst_19 : f32 to vector<2x18x128xf32>
    %15 = arith.addf %13, %14 : vector<2x18x128xf32>
    %16 = math.sqrt %15 : vector<2x18x128xf32>
    %c0_20 = arith.constant 0 : index
    %c0_21 = arith.constant 0 : index
    %c0_22 = arith.constant 0 : index
    %17 = vector.load %arg2[%c0_20, %c0_21, %c0_22] : memref<2x18x128xf32, #tpu.memory_space<vmem>>, vector<2x18x128xf32>
    tpu.vector_store %arg2[%c0_20, %c0_21, %c0_22], %16 {strides = array<i32>} : memref<2x18x128xf32, #tpu.memory_space<vmem>>, vector<2x18x128xf32>,
    return
  }
  func.func @transform_0(%arg0: i32) -> (i32, i32, i32, i32) {
    %c0_i32 = arith.constant 0 : i32
    %c0_i32_0 = arith.constant 0 : i32
    %c0_i32_1 = arith.constant 0 : i32
    %c0_i32_2 = arith.constant 0 : i32
    return %arg0, %c0_i32, %c0_i32_0, %c0_i32_1 : i32, i32, i32, i32
  }
  func.func @transform_1(%arg0: i32) -> (i32, i32, i32) {
    %c0_i32 = arith.constant 0 : i32
    %c0_i32_0 = arith.constant 0 : i32
    %c0_i32_1 = arith.constant 0 : i32
    return %arg0, %c0_i32, %c0_i32_0 : i32, i32, i32
  }
}

</mosaic_0001>

<llo_original>
// kernel: tpu_custom_call.1
$region0: #{tpu_custom_call.1}
  #allocation0 [shape = 'u32[]', space=smem, size = 0x4, offset = 0x4, fixed_abs, tag = 'smem constant byte address 0x4 - core index']
  #allocation1 [shape = 'u32[144,128]{1,0:T(1,128)}', space=vmem, size = 0x12000, scoped, tag = 'internal scratch']
  #allocation2 [shape = 'f32[2,20,130]{2,1,0:T(8,128)}', space=vmem, size = 0xc000, scoped, tag = 'scratch operand']
  #allocation5 [shape = 's32[]', space=sflag, size = 0x4, offset = 0, fixed_abs, tag = 'sflag constant byte address 0x0 - dummy sync flag']
  %s0 = inlined_call_operand.hbm [shape: f32[2,4,16,16], index: 0, kind: input, shape index: {}]
  %s1 = inlined_call_operand.vmem [shape: f32[2,18,128], index: 1, kind: output, shape index: {}]
  %s2 = sld [smem:[#allocation0]]
  $region18: #{tpu_custom_call.1} parent=0
    _
  %s4 = ssub.s32 1, %s2
  %s5 = scalar_select 0, %s4, %s2
  $region1: #{tpu_custom_call.1} parent=0
    #allocation3 [shape = 'u8[16384]{0}', space=vmem, size = 0x4000, scoped, tag = 'input window, operand 0, single buffered']
    #allocation4 [shape = 's32[1]{0}', space=sflag, size = 0x4, scoped, tag = 'scoped memory for tpu_custom_call.1']
    %6 = vsyncpa [#allocation4], 0
    // Predicated region
    $region2: #{tpu_custom_call.1} parent=1 // pred_check
      _
    $region3: #{tpu_custom_call.1} parent=1 // pred_check_branch
      %8 = sbr.rel (0) target = $region5
    $region4: #{tpu_custom_call.1} parent=1 // pred_region
      #allocation6 [shape = 'u32[6]{0}', space=smem, size = 0x18, scoped, tag = 'DMA stride descriptor']
      %s10 = ssub.s32 512, 512
      %11 = vsyncadd [#allocation4], %s10
      %s13 = sshll.u32 1, 14
      %s14 = sxor.u32 4294967295, %s13
      %s16 = sld [smem:[#allocation0]]
      %s17 = sadd.s32 2, %s16
      %s19 = sshll.u32 7, 26
      %s20 = sxor.u32 4294967295, %s19
      %s21 = sand.u32 0, %s20
      %s22 = sshll.u32 %s17, 26
      %s23 = sor.u32 %s21, %s22
      %s24 = sshll.u32 [#allocation3], 4
      %s25 = int_to_ptr.vmem [resolvable:$true] %s24
      %31 = sst [smem:[#allocation6]] 1024
      %s32 = scalar_lea.smem [#allocation6], 1
      %33 = sst [smem:[%s32]] 256
      %s34 = scalar_lea.smem [#allocation6], 2
      %35 = sst [smem:[%s34]] 2
      %s36 = scalar_lea.smem [#allocation6], 3
      %37 = sst [smem:[%s36]] 128
      %s38 = scalar_lea.smem [#allocation6], 4
      %39 = sst [smem:[%s38]] 128
      %s40 = scalar_lea.smem [#allocation6], 5
      %41 = sst [smem:[%s40]] 8
      %43 = dma.general %s0, 512, %s25, [#allocation4], [#allocation5], [#allocation6], %s23, 0
    $region5: #{tpu_custom_call.1} parent=1 // pred_fallthru
      _
    // Predicated region
    $region6: #{tpu_custom_call.1} parent=1 // pred_check
      _
    $region7: #{tpu_custom_call.1} parent=1 // pred_check_branch
      %45 = sbr.rel (0) target = $region9
    $region8: #{tpu_custom_call.1} parent=1 // pred_region
      %46 = dma.done [#allocation4], 512
    $region9: #{tpu_custom_call.1} parent=1 // pred_fallthru
      _
    %47 = vst [vmem:[#allocation2] sm:$0xff] 0.0
    %vm48 = vcmask 15360
    %49 = vst.msk [vmem:[#allocation2 + $0x8] sm:$0xff] %vm48, 0.0
    %50 = vst [vmem:[#allocation2 + $0x10] sm:$0xff] 0.0
    %51 = vst.msk [vmem:[#allocation2 + $0x18] sm:$0xff] %vm48, 0.0
    %52 = vst [vmem:[#allocation2 + $0x20] sm:$0xf] 0.0
    %vm53 = vcmask 11264
    %54 = vst.msk [vmem:[#allocation2 + $0x28] sm:$0xf] %vm53, 0.0
    %55 = vst [vmem:[#allocation2 + $0x30] sm:$0xff] 0.0
    %56 = vst.msk [vmem:[#allocation2 + $0x38] sm:$0xff] %vm48, 0.0
    %57 = vst [vmem:[#allocation2 + $0x40] sm:$0xff] 0.0
    %58 = vst.msk [vmem:[#allocation2 + $0x48] sm:$0xff] %vm48, 0.0
    %59 = vst [vmem:[#allocation2 + $0x50] sm:$0xf] 0.0
    %60 = vst.msk [vmem:[#allocation2 + $0x58] sm:$0xf] %vm53, 0.0
    %v61 = vld [vmem:[#allocation3] sm:$0xff]
    %v62 = vld [vmem:[#allocation3 + $0x8] sm:$0xff]
    %v63 = vld [vmem:[#allocation3 + $0x10] sm:$0xff]
    %v64 = vld [vmem:[#allocation3 + $0x18] sm:$0xff]
    %vm69 = vcmask 1041408
    %v70 = vrot.slane %v61, 6
    %v71 = vrot.slane %v62, 6
    %v72 = vsel %vm69, %v70, %v71
    %v73 = vrot.slane %v63, 6
    %v74 = vrot.slane %v64, 6
    %v75 = vsel %vm69, %v73, %v74
    %76 = vrot.lane.b32.xlu0 %v70, 2
    %v77 = vpop.permute.xlu0 %76
    %78 = vrot.lane.b32.xlu0 %v72, 2
    %v79 = vpop.permute.xlu0 %78
    %80 = vrot.lane.b32.xlu0 %v71, 2
    %v81 = vpop.permute.xlu0 %80
    %82 = vrot.lane.b32.xlu0 %v73, 2
    %v83 = vpop.permute.xlu0 %82
    %84 = vrot.lane.b32.xlu0 %v75, 2
    %v85 = vpop.permute.xlu0 %84
    %86 = vrot.lane.b32.xlu0 %v74, 2
    %v87 = vpop.permute.xlu0 %86
    %vm94 = vcmask 146450
    %95 = vst.msk [vmem:[#allocation2] sm:$0xfc] %vm94, %v77
    %vm96 = vcmask 146448
    %97 = vst.msk [vmem:[#allocation2 + $0x10] sm:$0xff] %vm96, %v79
    %vm98 = vcmask 140304
    %99 = vst.msk [vmem:[#allocation2 + $0x20] sm:$0x3] %vm98, %v81
    %100 = vst.msk [vmem:[#allocation2 + $0x30] sm:$0xfc] %vm94, %v83
    %101 = vst.msk [vmem:[#allocation2 + $0x40] sm:$0xff] %vm96, %v85
    %102 = vst.msk [vmem:[#allocation2 + $0x50] sm:$0x3] %vm98, %v87
    %v103 = vld [vmem:[#allocation2] sm:$0xff]
    %v104 = vld [vmem:[#allocation2 + $0x8] sm:$0xff]
    %v105 = vld [vmem:[#allocation2 + $0x10] sm:$0xff]
    %v106 = vld [vmem:[#allocation2 + $0x18] sm:$0xff]
    %v107 = vld [vmem:[#allocation2 + $0x20] sm:$0x3]
    %v108 = vld [vmem:[#allocation2 + $0x28] sm:$0x3]
    %v109 = vld [vmem:[#allocation2 + $0x30] sm:$0xff]
    %v110 = vld [vmem:[#allocation2 + $0x38] sm:$0xff]
    %v111 = vld [vmem:[#allocation2 + $0x40] sm:$0xff]
    %v112 = vld [vmem:[#allocation2 + $0x48] sm:$0xff]
    %v113 = vld [vmem:[#allocation2 + $0x50] sm:$0x3]
    %v114 = vld [vmem:[#allocation2 + $0x58] sm:$0x3]
    %v115 = vld [vmem:[#allocation2] sm:$0xfc]
    %v116 = vld [vmem:[#allocation2 + $0x8] sm:$0xfc]
    %v117 = vld [vmem:[#allocation2 + $0x20] sm:$0xf]
    %v118 = vld [vmem:[#allocation2 + $0x28] sm:$0xf]
    %v119 = vld [vmem:[#allocation2 + $0x30] sm:$0xfc]
    %v120 = vld [vmem:[#allocation2 + $0x38] sm:$0xfc]
    %v121 = vld [vmem:[#allocation2 + $0x50] sm:$0xf]
    %v122 = vld [vmem:[#allocation2 + $0x58] sm:$0xf]
    %v123 = vld [vmem:[#allocation2] sm:$0xfe]
    %v124 = vld [vmem:[#allocation2 + $0x20] sm:$0x7]
    %v125 = vld [vmem:[#allocation2 + $0x30] sm:$0xfe]
    %v126 = vld [vmem:[#allocation2 + $0x50] sm:$0x7]
    %v127 = vld [vmem:[#allocation2 + $0x8] sm:$0xfe]
    %v128 = vld [vmem:[#allocation2 + $0x28] sm:$0x7]
    %v129 = vld [vmem:[#allocation2 + $0x38] sm:$0xfe]
    %v130 = vld [vmem:[#allocation2 + $0x58] sm:$0x7]
    %v143 = vrot.slane %v103, 6
    %v144 = vrot.slane %v104, 6
    %v145 = vrot.slane %v105, 6
    %v146 = vsel %vm69, %v143, %v145
    %v147 = vrot.slane %v106, 6
    %v148 = vsel %vm69, %v144, %v147
    %v149 = vrot.slane %v107, 6
    %v150 = vsel %vm69, %v145, %v149
    %v151 = vrot.slane %v108, 6
    %v152 = vsel %vm69, %v147, %v151
    %v153 = vrot.slane %v109, 6
    %v154 = vrot.slane %v110, 6
    %v155 = vrot.slane %v111, 6
    %v156 = vsel %vm69, %v153, %v155
    %v157 = vrot.slane %v112, 6
    %v158 = vsel %vm69, %v154, %v157
    %v159 = vrot.slane %v113, 6
    %v160 = vsel %vm69, %v155, %v159
    %v161 = vrot.slane %v114, 6
    %v162 = vsel %vm69, %v157, %v161
    %v175 = vsub.f32 %v115, %v143
    %v176 = vsub.f32 %v116, %v144
    %v177 = vsub.f32 %v105, %v146
    %v178 = vsub.f32 %v106, %v148
    %v179 = vsub.f32 %v117, %v150
    %v180 = vsub.f32 %v118, %v152
    %v181 = vsub.f32 %v119, %v153
    %v182 = vsub.f32 %v120, %v154
    %v183 = vsub.f32 %v111, %v156
    %v184 = vsub.f32 %v112, %v158
    %v185 = vsub.f32 %v121, %v160
    %v186 = vsub.f32 %v122, %v162
    %191 = vrot.lane.b32.xlu0 %v123, 2
    %v192 = vpop.permute.xlu0 %191
    %193 = vrot.lane.b32.xlu0 %v105, 2
    %v194 = vpop.permute.xlu0 %193
    %195 = vrot.lane.b32.xlu0 %v124, 2
    %v196 = vpop.permute.xlu0 %195
    %197 = vrot.lane.b32.xlu0 %v125, 2
    %v198 = vpop.permute.xlu0 %197
    %199 = vrot.lane.b32.xlu0 %v111, 2
    %v200 = vpop.permute.xlu0 %199
    %201 = vrot.lane.b32.xlu0 %v126, 2
    %v202 = vpop.permute.xlu0 %201
    %v209 = vsub.f32 %v123, %v192
    %v210 = vsub.f32 %v127, %v192
    %v211 = vsub.f32 %v105, %v194
    %v212 = vsub.f32 %v106, %v194
    %v213 = vsub.f32 %v124, %v196
    %v214 = vsub.f32 %v128, %v196
    %v215 = vsub.f32 %v125, %v198
    %v216 = vsub.f32 %v129, %v198
    %v217 = vsub.f32 %v111, %v200
    %v218 = vsub.f32 %v112, %v200
    %v219 = vsub.f32 %v126, %v202
    %v220 = vsub.f32 %v130, %v202
    %v221 = vmul.f32 %v175, %v175
    %v222 = vmul.f32 %v176, %v176
    %v223 = vmul.f32 %v177, %v177
    %v224 = vmul.f32 %v178, %v178
    %v225 = vmul.f32 %v179, %v179
    %v226 = vmul.f32 %v180, %v180
    %v227 = vmul.f32 %v181, %v181
    %v228 = vmul.f32 %v182, %v182
    %v229 = vmul.f32 %v183, %v183
    %v230 = vmul.f32 %v184, %v184
    %v231 = vmul.f32 %v185, %v185
    %v232 = vmul.f32 %v186, %v186
    %v233 = vmul.f32 %v209, %v209
    %v234 = vmul.f32 %v210, %v210
    %v235 = vmul.f32 %v211, %v211
    %v236 = vmul.f32 %v212, %v212
    %v237 = vmul.f32 %v213, %v213
    %v238 = vmul.f32 %v214, %v214
    %v239 = vmul.f32 %v215, %v215
    %v240 = vmul.f32 %v216, %v216
    %v241 = vmul.f32 %v217, %v217
    %v242 = vmul.f32 %v218, %v218
    %v243 = vmul.f32 %v219, %v219
    %v244 = vmul.f32 %v220, %v220
    %vm257 = vcmask 1040384
    %v258 = vrot.slane %v233, 7
    %v259 = vrot.slane %v234, 7
    %v260 = vrot.slane %v235, 7
    %v261 = vsel %vm257, %v258, %v260
    %v262 = vrot.slane %v236, 7
    %v263 = vsel %vm257, %v259, %v262
    %v264 = vrot.slane %v237, 7
    %v265 = vsel %vm257, %v260, %v264
    %v266 = vrot.slane %v238, 7
    %v267 = vsel %vm257, %v262, %v266
    %v268 = vrot.slane %v239, 7
    %v269 = vrot.slane %v240, 7
    %v270 = vrot.slane %v241, 7
    %v271 = vsel %vm257, %v268, %v270
    %v272 = vrot.slane %v242, 7
    %v273 = vsel %vm257, %v269, %v272
    %v274 = vrot.slane %v243, 7
    %v275 = vsel %vm257, %v270, %v274
    %v276 = vrot.slane %v244, 7
    %v277 = vsel %vm257, %v272, %v276
    %278 = vrot.lane.b32.xlu0 %v258, 127
    %v279 = vpop.permute.xlu0 %278
    %280 = vrot.lane.b32.xlu0 %v259, 127
    %v281 = vpop.permute.xlu0 %280
    %282 = vrot.lane.b32.xlu0 %v261, 127
    %v283 = vpop.permute.xlu0 %282
    %284 = vrot.lane.b32.xlu0 %v263, 127
    %v285 = vpop.permute.xlu0 %284
    %286 = vrot.lane.b32.xlu0 %v265, 127
    %v287 = vpop.permute.xlu0 %286
    %288 = vrot.lane.b32.xlu0 %v267, 127
    %v289 = vpop.permute.xlu0 %288
    %290 = vrot.lane.b32.xlu0 %v268, 127
    %v291 = vpop.permute.xlu0 %290
    %292 = vrot.lane.b32.xlu0 %v269, 127
    %v293 = vpop.permute.xlu0 %292
    %294 = vrot.lane.b32.xlu0 %v271, 127
    %v295 = vpop.permute.xlu0 %294
    %296 = vrot.lane.b32.xlu0 %v273, 127
    %v297 = vpop.permute.xlu0 %296
    %298 = vrot.lane.b32.xlu0 %v275, 127
    %v299 = vpop.permute.xlu0 %298
    %300 = vrot.lane.b32.xlu0 %v277, 127
    %v301 = vpop.permute.xlu0 %300
    %vm302 = vcmask 1039360
    %v303 = vsel %vm302, %v279, %v281
    %v304 = vsel %vm302, %v283, %v285
    %v305 = vsel %vm302, %v287, %v289
    %v306 = vsel %vm302, %v291, %v293
    %v307 = vsel %vm302, %v295, %v297
    %v308 = vsel %vm302, %v299, %v301
    %v321 = vadd.f32 %v221, %v303
    %v322 = vadd.f32 %v222, %v281
    %v323 = vadd.f32 %v223, %v304
    %v324 = vadd.f32 %v224, %v285
    %v325 = vadd.f32 %v225, %v305
    %v326 = vadd.f32 %v226, %v289
    %v327 = vadd.f32 %v227, %v306
    %v328 = vadd.f32 %v228, %v293
    %v329 = vadd.f32 %v229, %v307
    %v330 = vadd.f32 %v230, %v297
    %v331 = vadd.f32 %v231, %v308
    %v332 = vadd.f32 %v232, %v301
    %v333 = vadd.f32 %v321, 1e-06
    %v334 = vadd.f32 %v322, 1e-06
    %v335 = vadd.f32 %v323, 1e-06
    %v336 = vadd.f32 %v324, 1e-06
    %v337 = vadd.f32 %v325, 1e-06
    %v338 = vadd.f32 %v326, 1e-06
    %v339 = vadd.f32 %v327, 1e-06
    %v340 = vadd.f32 %v328, 1e-06
    %v341 = vadd.f32 %v329, 1e-06
    %v342 = vadd.f32 %v330, 1e-06
    %v343 = vadd.f32 %v331, 1e-06
    %v344 = vadd.f32 %v332, 1e-06
    %v345 = vrsqrt.pop %v333
    %v346 = vmul.f32 %v333, %v345
    %vm347 = vcmp.eq.f32.partialorder %v333, inf
    %v348 = vsel %vm347, %v333, %v346
    %vm349 = vcmp.eq.f32.partialorder %v333, 0.0
    %v350 = vand.u32 %v333, 2147483648
    %v351 = vsel %vm349, %v350, %v348
    %v352 = vrsqrt.pop %v334
    %v353 = vmul.f32 %v334, %v352
    %vm354 = vcmp.eq.f32.partialorder %v334, inf
    %v355 = vsel %vm354, %v334, %v353
    %vm356 = vcmp.eq.f32.partialorder %v334, 0.0
    %v357 = vand.u32 %v334, 2147483648
    %v358 = vsel %vm356, %v357, %v355
    %v359 = vrsqrt.pop %v335
    %v360 = vmul.f32 %v335, %v359
    %vm361 = vcmp.eq.f32.partialorder %v335, inf
    %v362 = vsel %vm361, %v335, %v360
    %vm363 = vcmp.eq.f32.partialorder %v335, 0.0
    %v364 = vand.u32 %v335, 2147483648
    %v365 = vsel %vm363, %v364, %v362
    %v366 = vrsqrt.pop %v336
    %v367 = vmul.f32 %v336, %v366
    %vm368 = vcmp.eq.f32.partialorder %v336, inf
    %v369 = vsel %vm368, %v336, %v367
    %vm370 = vcmp.eq.f32.partialorder %v336, 0.0
    %v371 = vand.u32 %v336, 2147483648
    %v372 = vsel %vm370, %v371, %v369
    %v373 = vrsqrt.pop %v337
    %v374 = vmul.f32 %v337, %v373
    %vm375 = vcmp.eq.f32.partialorder %v337, inf
    %v376 = vsel %vm375, %v337, %v374
    %vm377 = vcmp.eq.f32.partialorder %v337, 0.0
    %v378 = vand.u32 %v337, 2147483648
    %v379 = vsel %vm377, %v378, %v376
    %v380 = vrsqrt.pop %v338
    %v381 = vmul.f32 %v338, %v380
    %vm382 = vcmp.eq.f32.partialorder %v338, inf
    %v383 = vsel %vm382, %v338, %v381
    %vm384 = vcmp.eq.f32.partialorder %v338, 0.0
    %v385 = vand.u32 %v338, 2147483648
    %v386 = vsel %vm384, %v385, %v383
    %v387 = vrsqrt.pop %v339
    %v388 = vmul.f32 %v339, %v387
    %vm389 = vcmp.eq.f32.partialorder %v339, inf
    %v390 = vsel %vm389, %v339, %v388
    %vm391 = vcmp.eq.f32.partialorder %v339, 0.0
    %v392 = vand.u32 %v339, 2147483648
    %v393 = vsel %vm391, %v392, %v390
    %v394 = vrsqrt.pop %v340
    %v395 = vmul.f32 %v340, %v394
    %vm396 = vcmp.eq.f32.partialorder %v340, inf
    %v397 = vsel %vm396, %v340, %v395
    %vm398 = vcmp.eq.f32.partialorder %v340, 0.0
    %v399 = vand.u32 %v340, 2147483648
    %v400 = vsel %vm398, %v399, %v397
    %v401 = vrsqrt.pop %v341
    %v402 = vmul.f32 %v341, %v401
    %vm403 = vcmp.eq.f32.partialorder %v341, inf
    %v404 = vsel %vm403, %v341, %v402
    %vm405 = vcmp.eq.f32.partialorder %v341, 0.0
    %v406 = vand.u32 %v341, 2147483648
    %v407 = vsel %vm405, %v406, %v404
    %v408 = vrsqrt.pop %v342
    %v409 = vmul.f32 %v342, %v408
    %vm410 = vcmp.eq.f32.partialorder %v342, inf
    %v411 = vsel %vm410, %v342, %v409
    %vm412 = vcmp.eq.f32.partialorder %v342, 0.0
    %v413 = vand.u32 %v342, 2147483648
    %v414 = vsel %vm412, %v413, %v411
    %v415 = vrsqrt.pop %v343
    %v416 = vmul.f32 %v343, %v415
    %vm417 = vcmp.eq.f32.partialorder %v343, inf
    %v418 = vsel %vm417, %v343, %v416
    %vm419 = vcmp.eq.f32.partialorder %v343, 0.0
    %v420 = vand.u32 %v343, 2147483648
    %v421 = vsel %vm419, %v420, %v418
    %v422 = vrsqrt.pop %v344
    %v423 = vmul.f32 %v344, %v422
    %vm424 = vcmp.eq.f32.partialorder %v344, inf
    %v425 = vsel %vm424, %v344, %v423
    %vm426 = vcmp.eq.f32.partialorder %v344, 0.0
    %v427 = vand.u32 %v344, 2147483648
    %v428 = vsel %vm426, %v427, %v425
    %441 = vrot.lane.b32.xlu0 %v351, 127
    %v442 = vpop.permute.xlu0 %441
    %443 = vrot.lane.b32.xlu0 %v358, 127
    %v444 = vpop.permute.xlu0 %443
    %445 = vrot.lane.b32.xlu0 %v365, 127
    %v446 = vpop.permute.xlu0 %445
    %447 = vrot.lane.b32.xlu0 %v372, 127
    %v448 = vpop.permute.xlu0 %447
    %449 = vrot.lane.b32.xlu0 %v379, 127
    %v450 = vpop.permute.xlu0 %449
    %451 = vrot.lane.b32.xlu0 %v386, 127
    %v452 = vpop.permute.xlu0 %451
    %453 = vrot.lane.b32.xlu0 %v393, 127
    %v454 = vpop.permute.xlu0 %453
    %455 = vrot.lane.b32.xlu0 %v400, 127
    %v456 = vpop.permute.xlu0 %455
    %457 = vrot.lane.b32.xlu0 %v407, 127
    %v458 = vpop.permute.xlu0 %457
    %459 = vrot.lane.b32.xlu0 %v414, 127
    %v460 = vpop.permute.xlu0 %459
    %461 = vrot.lane.b32.xlu0 %v421, 127
    %v462 = vpop.permute.xlu0 %461
    %463 = vrot.lane.b32.xlu0 %v428, 127
    %v464 = vpop.permute.xlu0 %463
    %v465 = vsel %vm302, %v442, %v444
    %v466 = vsel %vm302, %v446, %v448
    %v467 = vsel %vm302, %v450, %v452
    %v468 = vsel %vm302, %v454, %v456
    %v469 = vsel %vm302, %v458, %v460
    %v470 = vsel %vm302, %v462, %v464
    %477 = vst [vmem:[%s1 - $0x2] sm:$0xfc] %v465
    %478 = vst [vmem:[%s1 + $0x6] sm:$0xff] %v466
    %479 = vst [vmem:[%s1 + $0xe] sm:$0xf] %v467
    %480 = vst [vmem:[%s1 + $0x16] sm:$0xfc] %v468
    %481 = vst [vmem:[%s1 + $0x1e] sm:$0xff] %v469
    %482 = vst [vmem:[%s1 + $0x26] sm:$0xf] %v470
    // Predicated region
    $region10: #{tpu_custom_call.1} parent=1 // pred_check
      _
    $region11: #{tpu_custom_call.1} parent=1 // pred_check_branch
      %484 = sbr.rel (0) target = $region13
    $region12: #{tpu_custom_call.1} parent=1 // pred_region
      _
    $region13: #{tpu_custom_call.1} parent=1 // pred_fallthru
      _
    // Predicated region
    $region14: #{tpu_custom_call.1} parent=1 // pred_check
      _
    $region15: #{tpu_custom_call.1} parent=1 // pred_check_branch
      %486 = sbr.rel (0) target = $region17
    $region16: #{tpu_custom_call.1} parent=1 // pred_region
      _
    $region17: #{tpu_custom_call.1} parent=1 // pred_fallthru
      _
    %487 = vsyncpa [#allocation4], 1

</llo_original>
